<compile_context>
chip_gen: v7x
topology: tpu7x:2x2x1
jax: 0.10.0
libtpu: 0.0.40
codegen_flags: <defaults>
</compile_context>

<pallas_src>
import jax
import jax.numpy as jnp
from jax.experimental import pallas as pl
from jax.experimental.pallas import tpu as pltpu

EMB = 32          # embedding_size
NOBJ = 4          # 4 objects (agent + 3 boxes), 4 bbox coords each
WIDE = NOBJ * EMB # 128 lanes for the fused per-object streams
DEFAULT_TILE = 1024


def _round_up(a, m):
    return ((a + m - 1) // m) * m


# ---------------------------------------------------------------------------
# Kernel: one tile of TILE rows, all weights resident in VMEM.
# ---------------------------------------------------------------------------
def bbox_interaction_kernel(
    x_ref,                      # (TILE, 16)
    wfirst_ref, bfirst_ref,     # (16, 384), (1, 384)
    wself2_ref, bself2_ref,     # (128, 128), (1, 128)
    wrel2_ref, brel2_ref,       # (128, 128), (1, 128)   (bias already *3)
    waff1_ref, baff1_ref,       # (128, 128), (1, 128)
    waff2_ref, baff2_ref,       # (128, 32),  (1, 32)
    out_ref,                    # (TILE, 32)
):
    x = x_ref[...]                                               # (TILE, 16)

    # Fused first-layer projections: [self-core layer0 | rel_i | rel_j]
    pre = jnp.dot(x, wfirst_ref[...],
                  preferred_element_type=jnp.float32) + bfirst_ref[...]   # (TILE, 384)
    h_all = jnp.maximum(pre[:, 0:WIDE], 0.0)                     # relu(self core 0), (TILE,128)
    pre_i = pre[:, WIDE:2 * WIDE]                                # obj_i @ wr0[:4] + br0
    pre_j = pre[:, 2 * WIDE:3 * WIDE]                            # obj_j @ wr0[4:]

    # Self dynamics: block-diag [wa1, wb1, wb1, wb1] + residual.
    self_dyn = (jnp.dot(h_all, wself2_ref[...], preferred_element_type=jnp.float32)
                + bself2_ref[...] + h_all)                       # (TILE, 128)

    # Relational dynamics.  For block i we need sum_{j != i} relu(pre_i[i] + pre_j[j]).
    # Rolling pre_j by 32/64/96 lanes aligns each of the 3 "other" objects with block i.
    hsum = jnp.maximum(pre_i + pltpu.roll(pre_j, 1 * EMB, axis=1), 0.0)
    hsum = hsum + jnp.maximum(pre_i + pltpu.roll(pre_j, 2 * EMB, axis=1), 0.0)
    hsum = hsum + jnp.maximum(pre_i + pltpu.roll(pre_j, 3 * EMB, axis=1), 0.0)
    # Linearity collapse of rel layer 1: sum_j (h @ wr1 + br1 + h) = hsum @ wr1 + 3*br1 + hsum.
    rel_dyn = (jnp.dot(hsum, wrel2_ref[...], preferred_element_type=jnp.float32)
               + brel2_ref[...] + hsum)                          # (TILE, 128)

    dp = self_dyn + rel_dyn                                      # (TILE, 128)

    # Affector layer 0 (block-diag wf0 x4).
    a1 = jnp.maximum(jnp.dot(dp, waff1_ref[...], preferred_element_type=jnp.float32)
                     + baff1_ref[...], 0.0)                      # (TILE, 128)

    # Affector layer 1 + residual + mean over 4 objects, collapsed into one matmul:
    #   0.25 * sum_k (a1_k @ wf1 + bf1 + a1_k) = 0.25 * a1_all @ vstack([wf1+I]*4) + bf1
    out = 0.25 * jnp.dot(a1, waff2_ref[...],
                         preferred_element_type=jnp.float32) + baff2_ref[...]
    out_ref[...] = out.astype(out_ref.dtype)


# ---------------------------------------------------------------------------
# Wrapper-side weight fusion.
# ---------------------------------------------------------------------------
def _block_diag4(mats):
    """4 x (k, EMB) -> (4k, 4*EMB) block diagonal."""
    k = mats[0].shape[0]
    out = jnp.zeros((4 * k, 4 * EMB), jnp.float32)
    for i, m in enumerate(mats):
        out = out.at[i * k:(i + 1) * k, i * EMB:(i + 1) * EMB].set(m)
    return out


def fuse_params(p):
    eye = jnp.eye(EMB, dtype=jnp.float32)

    w_self1 = _block_diag4([p["wa0"], p["wb0"], p["wb0"], p["wb0"]])        # (16,128)
    b_self1 = jnp.concatenate([p["ba0"], p["bb0"], p["bb0"], p["bb0"]], 1)  # (1,128)
    w_rel_i = _block_diag4([p["wr0"][:4, :]] * 4)                           # (16,128)
    w_rel_j = _block_diag4([p["wr0"][4:, :]] * 4)                           # (16,128)
    b_rel_i = jnp.tile(p["br0"], (1, 4))                                    # (1,128)

    w_first = jnp.concatenate([w_self1, w_rel_i, w_rel_j], axis=1)          # (16,384)
    b_first = jnp.concatenate([b_self1, b_rel_i, jnp.zeros_like(b_rel_i)], axis=1)

    w_self2 = _block_diag4([p["wa1"], p["wb1"], p["wb1"], p["wb1"]])        # (128,128)
    b_self2 = jnp.concatenate([p["ba1"], p["bb1"], p["bb1"], p["bb1"]], 1)  # (1,128)

    w_rel2 = _block_diag4([p["wr1"]] * 4)                                   # (128,128)
    b_rel2 = 3.0 * jnp.tile(p["br1"], (1, 4))                               # (1,128)

    w_aff1 = _block_diag4([p["wf0"]] * 4)                                   # (128,128)
    b_aff1 = jnp.tile(p["bf0"], (1, 4))                                     # (1,128)

    w_aff2 = jnp.concatenate([p["wf1"] + eye] * 4, axis=0)                  # (128,32)
    b_aff2 = p["bf1"]                                                       # (1,32)

    return (w_first, b_first, w_self2, b_self2, w_rel2, b_rel2,
            w_aff1, b_aff1, w_aff2, b_aff2)


# ---------------------------------------------------------------------------
# Forward wrapper.
# ---------------------------------------------------------------------------
def bbox_interaction_forward(x, params, tile=DEFAULT_TILE):
    """x: (B, T, C, 4, 4) float32. Returns (frames, embs) like the torch module."""
    b, t, c, h, w = x.shape
    assert h == 4 and w == 4, "expected 4 objects x 4 bbox coords"
    n = b * t * c
    x2d = x.reshape(n, h * w).astype(jnp.float32)

    fused = fuse_params(params)

    # Row tiling: TILE multiple of 8, pad N up to a multiple of TILE.
    tile_rows = min(tile, _round_up(n, 8))
    n_pad = _round_up(n, tile_rows)
    if n_pad != n:
        x2d = jnp.pad(x2d, ((0, n_pad - n), (0, 0)))
    grid = (n_pad // tile_rows,)

    def weight_spec(a):
        nd = a.ndim
        return pl.BlockSpec(a.shape, lambda i, _nd=nd: (0,) * _nd)  # VMEM-resident

    in_specs = ([pl.BlockSpec((tile_rows, h * w), lambda i: (i, 0))]
                + [weight_spec(a) for a in fused])
    out_specs = pl.BlockSpec((tile_rows, EMB), lambda i: (i, 0))

    embs = pl.pallas_call(
        bbox_interaction_kernel,
        out_shape=jax.ShapeDtypeStruct((n_pad, EMB), jnp.float32),
        grid=grid,
        in_specs=in_specs,
        out_specs=out_specs,
        compiler_params=pltpu.CompilerParams(
            dimension_semantics=("parallel",)),
    )(x2d, *fused)

    embs = embs[:n]
    frames = x.reshape(n, h, w)            # matches torch: x.view(b*t*c, h, w)
    embs = embs.reshape(b, t, c * EMB)     # matches torch: final.view(b, t, -1)
    return frames, embs


# ---------------------------------------------------------------------------
# Param init + pure-JAX reference (for validation).
# ---------------------------------------------------------------------------
def init_params(key, emb):
    """Deterministic nn.Linear-style init (uniform +-1/sqrt(fan_in)). Weights as (in, out)."""
    def linear(k, fan_in, fan_out):
        kw, kb = jax.random.split(k)
        bound = 1.0 / float(fan_in) ** 0.5
        w = jax.random.uniform(kw, (fan_in, fan_out), jnp.float32, -bound, bound)
        bvec = jax.random.uniform(kb, (1, fan_out), jnp.float32, -bound, bound)
        return w, bvec

    keys = jax.random.split(key, 8)
    p = {}
    p["wa0"], p["ba0"] = linear(keys[0], 4, emb)
    p["wa1"], p["ba1"] = linear(keys[1], emb, emb)
    p["wb0"], p["bb0"] = linear(keys[2], 4, emb)
    p["wb1"], p["bb1"] = linear(keys[3], emb, emb)
    p["wr0"], p["br0"] = linear(keys[4], 8, emb)
    p["wr1"], p["br1"] = linear(keys[5], emb, emb)
    p["wf0"], p["bf0"] = linear(keys[6], emb, emb)
    p["wf1"], p["bf1"] = linear(keys[7], emb, emb)
    return p


def reference_forward(x, p):
    """Pure-JAX port of the PyTorch forward, used to validate the kernel."""
    b, t, c, h, w = x.shape
    n = b * t * c
    xf = x.reshape(n, h, w)
    agent = xf[:, 0, :]
    box = xf[:, 1:, :].reshape(n * 3, w)

    h0 = jax.nn.relu(agent @ p["wa0"] + p["ba0"])
    sa = (h0 @ p["wa1"] + p["ba1"] + h0).reshape(n, 1, EMB)
    h1 = jax.nn.relu(box @ p["wb0"] + p["bb0"])
    sb = (h1 @ p["wb1"] + p["bb1"] + h1).reshape(n, 3, EMB)
    self_dyn = jnp.concatenate([sa, sb], axis=1)

    objs = [xf[:, i, :] for i in range(4)]
    combos = []
    for i in range(4):
        for j in range(4):
            if i != j:
                combos.append(jnp.concatenate([objs[i], objs[j]], axis=1))
    rc = jnp.concatenate(combos, axis=0)            # (12n, 8)
    r0 = jax.nn.relu(rc @ p["wr0"] + p["br0"])
    r1 = r0 @ p["wr1"] + p["br1"] + r0
    chunks = jnp.split(r1, 12, axis=0)
    rel = jnp.stack(
        [chunks[3 * i] + chunks[3 * i + 1] + chunks[3 * i + 2] for i in range(4)],
        axis=1)

    dp = (self_dyn + rel).reshape(-1, EMB)
    a1 = jax.nn.relu(dp @ p["wf0"] + p["bf0"])
    a2 = a1 @ p["wf1"] + p["bf1"] + a1
    final = a2.reshape(-1, 4, EMB).mean(axis=1)
    return final.reshape(b, t, -1)


if __name__ == "__main__":
    key = jax.random.PRNGKey(0)
    k_x, k_p = jax.random.split(key)

    b, t, c = 2, 4, 2                               # num_ctx_frames = c
    x = jax.random.uniform(k_x, (b, t, c, 4, 4), dtype=jnp.float32)
    params = init_params(k_p, EMB)

    frames, embs = bbox_interaction_forward(x, params)
    jax.block_until_ready(embs)

    ref = reference_forward(x, params)
    assert embs.shape == (b, t, c * EMB)
    assert frames.shape == (b * t * c, 4, 4)
    assert jnp.allclose(embs, ref, atol=1e-4, rtol=1e-4), "kernel mismatch vs JAX reference"

    print("KERNEL_OK")
</pallas_src>

<mosaic_0001>
module attributes {stable_mosaic.version = 11 : i64} {
  func.func @bbox_interaction_kernel(%arg0: i32, %arg1: memref<16x16xf32, #tpu.memory_space<vmem>>, %arg2: memref<16x384xf32, #tpu.memory_space<vmem>>, %arg3: memref<1x384xf32, #tpu.memory_space<vmem>>, %arg4: memref<128x128xf32, #tpu.memory_space<vmem>>, %arg5: memref<1x128xf32, #tpu.memory_space<vmem>>, %arg6: memref<128x128xf32, #tpu.memory_space<vmem>>, %arg7: memref<1x128xf32, #tpu.memory_space<vmem>>, %arg8: memref<128x128xf32, #tpu.memory_space<vmem>>, %arg9: memref<1x128xf32, #tpu.memory_space<vmem>>, %arg10: memref<128x32xf32, #tpu.memory_space<vmem>>, %arg11: memref<1x32xf32, #tpu.memory_space<vmem>>, %arg12: memref<16x32xf32, #tpu.memory_space<vmem>>) attributes {dimension_semantics = [#tpu.dimension_semantics<parallel>], iteration_bounds = array<i64: 1>, scalar_prefetch = 0 : i64, scratch_operands = 0 : i64, tpu.core_type = #tpu.core_type<tc>, window_params = [{transform_indices = @transform_0, window_bounds = array<i64: 16, 16>}, {pipeline_mode = #tpu.pipeline_mode<synchronous>, transform_indices = @transform_1, window_bounds = array<i64: 16, 384>}, {pipeline_mode = #tpu.pipeline_mode<synchronous>, transform_indices = @transform_2, window_bounds = array<i64: 1, 384>}, {pipeline_mode = #tpu.pipeline_mode<synchronous>, transform_indices = @transform_3, window_bounds = array<i64: 128, 128>}, {pipeline_mode = #tpu.pipeline_mode<synchronous>, transform_indices = @transform_4, window_bounds = array<i64: 1, 128>}, {pipeline_mode = #tpu.pipeline_mode<synchronous>, transform_indices = @transform_5, window_bounds = array<i64: 128, 128>}, {pipeline_mode = #tpu.pipeline_mode<synchronous>, transform_indices = @transform_6, window_bounds = array<i64: 1, 128>}, {pipeline_mode = #tpu.pipeline_mode<synchronous>, transform_indices = @transform_7, window_bounds = array<i64: 128, 128>}, {pipeline_mode = #tpu.pipeline_mode<synchronous>, transform_indices = @transform_8, window_bounds = array<i64: 1, 128>}, {pipeline_mode = #tpu.pipeline_mode<synchronous>, transform_indices = @transform_9, window_bounds = array<i64: 128, 32>}, {pipeline_mode = #tpu.pipeline_mode<synchronous>, transform_indices = @transform_10, window_bounds = array<i64: 1, 32>}, {transform_indices = @transform_11, window_bounds = array<i64: 16, 32>}]} {
    %c0 = arith.constant 0 : index
    %c0_0 = arith.constant 0 : index
    %0 = vector.load %arg1[%c0, %c0_0] : memref<16x16xf32, #tpu.memory_space<vmem>>, vector<16x16xf32>
    %c0_1 = arith.constant 0 : index
    %c0_2 = arith.constant 0 : index
    %1 = vector.load %arg2[%c0_1, %c0_2] : memref<16x384xf32, #tpu.memory_space<vmem>>, vector<16x384xf32>
    %cst = arith.constant dense<0.000000e+00> : vector<16x384xf32>
    %2 = tpu.matmul %0, %1, %cst {dimension_numbers = #tpu.dot_dimension_numbers<[1], [0], [0], [1], [0, 0, 1, 1], [], []>} : vector<16x16xf32>, vector<16x384xf32>, vector<16x384xf32> -> vector<16x384xf32>
    %c0_3 = arith.constant 0 : index
    %c0_4 = arith.constant 0 : index
    %3 = vector.load %arg3[%c0_3, %c0_4] : memref<1x384xf32, #tpu.memory_space<vmem>>, vector<1x384xf32>
    %4 = vector.broadcast %3 : vector<1x384xf32> to vector<16x384xf32>
    %5 = arith.addf %2, %4 : vector<16x384xf32>
    %6 = vector.extract_strided_slice %5 {offsets = [0, 0], sizes = [16, 128], strides = [1, 1]} : vector<16x384xf32> to vector<16x128xf32>
    %cst_5 = arith.constant 0.000000e+00 : f32
    %7 = vector.broadcast %cst_5 : f32 to vector<16x128xf32>
    %8 = arith.maximumf %6, %7 : vector<16x128xf32>
    %9 = vector.extract_strided_slice %5 {offsets = [0, 128], sizes = [16, 128], strides = [1, 1]} : vector<16x384xf32> to vector<16x128xf32>
    %10 = vector.extract_strided_slice %5 {offsets = [0, 256], sizes = [16, 128], strides = [1, 1]} : vector<16x384xf32> to vector<16x128xf32>
    %c0_6 = arith.constant 0 : index
    %c0_7 = arith.constant 0 : index
    %11 = vector.load %arg4[%c0_6, %c0_7] : memref<128x128xf32, #tpu.memory_space<vmem>>, vector<128x128xf32>
    %cst_8 = arith.constant dense<0.000000e+00> : vector<16x128xf32>
    %12 = tpu.matmul %8, %11, %cst_8 {dimension_numbers = #tpu.dot_dimension_numbers<[1], [0], [0], [1], [0, 0, 1, 1], [], []>} : vector<16x128xf32>, vector<128x128xf32>, vector<16x128xf32> -> vector<16x128xf32>
    %c0_9 = arith.constant 0 : index
    %c0_10 = arith.constant 0 : index
    %13 = vector.load %arg5[%c0_9, %c0_10] : memref<1x128xf32, #tpu.memory_space<vmem>>, vector<1x128xf32>
    %14 = vector.broadcast %13 : vector<1x128xf32> to vector<16x128xf32>
    %15 = arith.addf %12, %14 : vector<16x128xf32>
    %16 = arith.addf %15, %8 : vector<16x128xf32>
    %c32_i32 = arith.constant 32 : i32
    %17 = tpu.dynamic_rotate %10 by %c32_i32 dim 1 : vector<16x128xf32>, i32 -> vector<16x128xf32>
    %18 = arith.addf %9, %17 : vector<16x128xf32>
    %cst_11 = arith.constant 0.000000e+00 : f32
    %19 = vector.broadcast %cst_11 : f32 to vector<16x128xf32>
    %20 = arith.maximumf %18, %19 : vector<16x128xf32>
    %c64_i32 = arith.constant 64 : i32
    %21 = tpu.dynamic_rotate %10 by %c64_i32 dim 1 : vector<16x128xf32>, i32 -> vector<16x128xf32>
    %22 = arith.addf %9, %21 : vector<16x128xf32>
    %cst_12 = arith.constant 0.000000e+00 : f32
    %23 = vector.broadcast %cst_12 : f32 to vector<16x128xf32>
    %24 = arith.maximumf %22, %23 : vector<16x128xf32>
    %25 = arith.addf %20, %24 : vector<16x128xf32>
    %c96_i32 = arith.constant 96 : i32
    %26 = tpu.dynamic_rotate %10 by %c96_i32 dim 1 : vector<16x128xf32>, i32 -> vector<16x128xf32>
    %27 = arith.addf %9, %26 : vector<16x128xf32>
    %cst_13 = arith.constant 0.000000e+00 : f32
    %28 = vector.broadcast %cst_13 : f32 to vector<16x128xf32>
    %29 = arith.maximumf %27, %28 : vector<16x128xf32>
    %30 = arith.addf %25, %29 : vector<16x128xf32>
    %c0_14 = arith.constant 0 : index
    %c0_15 = arith.constant 0 : index
    %31 = vector.load %arg6[%c0_14, %c0_15] : memref<128x128xf32, #tpu.memory_space<vmem>>, vector<128x128xf32>
    %cst_16 = arith.constant dense<0.000000e+00> : vector<16x128xf32>
    %32 = tpu.matmul %30, %31, %cst_16 {dimension_numbers = #tpu.dot_dimension_numbers<[1], [0], [0], [1], [0, 0, 1, 1], [], []>} : vector<16x128xf32>, vector<128x128xf32>, vector<16x128xf32> -> vector<16x128xf32>
    %c0_17 = arith.constant 0 : index
    %c0_18 = arith.constant 0 : index
    %33 = vector.load %arg7[%c0_17, %c0_18] : memref<1x128xf32, #tpu.memory_space<vmem>>, vector<1x128xf32>
    %34 = vector.broadcast %33 : vector<1x128xf32> to vector<16x128xf32>
    %35 = arith.addf %32, %34 : vector<16x128xf32>
    %36 = arith.addf %35, %30 : vector<16x128xf32>
    %37 = arith.addf %16, %36 : vector<16x128xf32>
    %c0_19 = arith.constant 0 : index
    %c0_20 = arith.constant 0 : index
    %38 = vector.load %arg8[%c0_19, %c0_20] : memref<128x128xf32, #tpu.memory_space<vmem>>, vector<128x128xf32>
    %cst_21 = arith.constant dense<0.000000e+00> : vector<16x128xf32>
    %39 = tpu.matmul %37, %38, %cst_21 {dimension_numbers = #tpu.dot_dimension_numbers<[1], [0], [0], [1], [0, 0, 1, 1], [], []>} : vector<16x128xf32>, vector<128x128xf32>, vector<16x128xf32> -> vector<16x128xf32>
    %c0_22 = arith.constant 0 : index
    %c0_23 = arith.constant 0 : index
    %40 = vector.load %arg9[%c0_22, %c0_23] : memref<1x128xf32, #tpu.memory_space<vmem>>, vector<1x128xf32>
    %41 = vector.broadcast %40 : vector<1x128xf32> to vector<16x128xf32>
    %42 = arith.addf %39, %41 : vector<16x128xf32>
    %cst_24 = arith.constant 0.000000e+00 : f32
    %43 = vector.broadcast %cst_24 : f32 to vector<16x128xf32>
    %44 = arith.maximumf %42, %43 : vector<16x128xf32>
    %c0_25 = arith.constant 0 : index
    %c0_26 = arith.constant 0 : index
    %45 = vector.load %arg10[%c0_25, %c0_26] : memref<128x32xf32, #tpu.memory_space<vmem>>, vector<128x32xf32>
    %cst_27 = arith.constant dense<0.000000e+00> : vector<16x32xf32>
    %46 = tpu.matmul %44, %45, %cst_27 {dimension_numbers = #tpu.dot_dimension_numbers<[1], [0], [0], [1], [0, 0, 1, 1], [], []>} : vector<16x128xf32>, vector<128x32xf32>, vector<16x32xf32> -> vector<16x32xf32>
    %cst_28 = arith.constant 2.500000e-01 : f32
    %47 = vector.broadcast %cst_28 : f32 to vector<16x32xf32>
    %48 = arith.mulf %47, %46 : vector<16x32xf32>
    %c0_29 = arith.constant 0 : index
    %c0_30 = arith.constant 0 : index
    %49 = vector.load %arg11[%c0_29, %c0_30] : memref<1x32xf32, #tpu.memory_space<vmem>>, vector<1x32xf32>
    %50 = vector.broadcast %49 : vector<1x32xf32> to vector<16x32xf32>
    %51 = arith.addf %48, %50 : vector<16x32xf32>
    %c0_31 = arith.constant 0 : index
    %c0_32 = arith.constant 0 : index
    %52 = vector.load %arg12[%c0_31, %c0_32] : memref<16x32xf32, #tpu.memory_space<vmem>>, vector<16x32xf32>
    tpu.vector_store %arg12[%c0_31, %c0_32], %51 {strides = array<i32>} : memref<16x32xf32, #tpu.memory_space<vmem>>, vector<16x32xf32>,
    return
  }
  func.func @transform_0(%arg0: i32) -> (i32, i32) {
    %c0_i32 = arith.constant 0 : i32
    %c0_i32_0 = arith.constant 0 : i32
    return %arg0, %c0_i32 : i32, i32
  }
  func.func @transform_1(%arg0: i32) -> (i32, i32) {
    %c0_i32 = arith.constant 0 : i32
    %c0_i32_0 = arith.constant 0 : i32
    %c0_i32_1 = arith.constant 0 : i32
    return %c0_i32, %c0_i32_0 : i32, i32
  }
  func.func @transform_2(%arg0: i32) -> (i32, i32) {
    %c0_i32 = arith.constant 0 : i32
    %c0_i32_0 = arith.constant 0 : i32
    %c0_i32_1 = arith.constant 0 : i32
    return %c0_i32, %c0_i32_0 : i32, i32
  }
  func.func @transform_3(%arg0: i32) -> (i32, i32) {
    %c0_i32 = arith.constant 0 : i32
    %c0_i32_0 = arith.constant 0 : i32
    %c0_i32_1 = arith.constant 0 : i32
    return %c0_i32, %c0_i32_0 : i32, i32
  }
  func.func @transform_4(%arg0: i32) -> (i32, i32) {
    %c0_i32 = arith.constant 0 : i32
    %c0_i32_0 = arith.constant 0 : i32
    %c0_i32_1 = arith.constant 0 : i32
    return %c0_i32, %c0_i32_0 : i32, i32
  }
  func.func @transform_5(%arg0: i32) -> (i32, i32) {
    %c0_i32 = arith.constant 0 : i32
    %c0_i32_0 = arith.constant 0 : i32
    %c0_i32_1 = arith.constant 0 : i32
    return %c0_i32, %c0_i32_0 : i32, i32
  }
  func.func @transform_6(%arg0: i32) -> (i32, i32) {
    %c0_i32 = arith.constant 0 : i32
    %c0_i32_0 = arith.constant 0 : i32
    %c0_i32_1 = arith.constant 0 : i32
    return %c0_i32, %c0_i32_0 : i32, i32
  }
  func.func @transform_7(%arg0: i32) -> (i32, i32) {
    %c0_i32 = arith.constant 0 : i32
    %c0_i32_0 = arith.constant 0 : i32
    %c0_i32_1 = arith.constant 0 : i32
    return %c0_i32, %c0_i32_0 : i32, i32
  }
  func.func @transform_8(%arg0: i32) -> (i32, i32) {
    %c0_i32 = arith.constant 0 : i32
    %c0_i32_0 = arith.constant 0 : i32
    %c0_i32_1 = arith.constant 0 : i32
    return %c0_i32, %c0_i32_0 : i32, i32
  }
  func.func @transform_9(%arg0: i32) -> (i32, i32) {
    %c0_i32 = arith.constant 0 : i32
    %c0_i32_0 = arith.constant 0 : i32
    %c0_i32_1 = arith.constant 0 : i32
    return %c0_i32, %c0_i32_0 : i32, i32
  }
  func.func @transform_10(%arg0: i32) -> (i32, i32) {
    %c0_i32 = arith.constant 0 : i32
    %c0_i32_0 = arith.constant 0 : i32
    %c0_i32_1 = arith.constant 0 : i32
    return %c0_i32, %c0_i32_0 : i32, i32
  }
  func.func @transform_11(%arg0: i32) -> (i32, i32) {
    %c0_i32 = arith.constant 0 : i32
    %c0_i32_0 = arith.constant 0 : i32
    return %arg0, %c0_i32 : i32, i32
  }
}

</mosaic_0001>

<llo_original>
// kernel: tpu_custom_call.1
$region0: #{tpu_custom_call.1}
  #allocation0 [shape = 'u32[]', space=smem, size = 0x4, offset = 0x4, fixed_abs, tag = 'smem constant byte address 0x4 - core index']
  #allocation1 [shape = 'u32[144,128]{1,0:T(1,128)}', space=vmem, size = 0x12000, scoped, tag = 'internal scratch']
  %s0 = inlined_call_operand.vmem [shape: f32[16,16], index: 0, kind: input, shape index: {}]
  %s1 = inlined_call_operand.hbm [shape: f32[16,384], index: 1, kind: input, shape index: {}]
  %s2 = inlined_call_operand.vmem [shape: f32[1,384], index: 2, kind: input, shape index: {}]
  %s3 = inlined_call_operand.vmem [shape: f32[128,128], index: 3, kind: input, shape index: {}]
  %s4 = inlined_call_operand.vmem [shape: f32[1,128], index: 4, kind: input, shape index: {}]
  %s5 = inlined_call_operand.hbm [shape: f32[128,128], index: 5, kind: input, shape index: {}]
  %s6 = inlined_call_operand.vmem [shape: f32[1,128], index: 6, kind: input, shape index: {}]
  %s7 = inlined_call_operand.hbm [shape: f32[128,128], index: 7, kind: input, shape index: {}]
  %s8 = inlined_call_operand.vmem [shape: f32[1,128], index: 8, kind: input, shape index: {}]
  %s9 = inlined_call_operand.vmem [shape: f32[128,32], index: 9, kind: input, shape index: {}]
  %s10 = inlined_call_operand.vmem [shape: f32[1,32], index: 10, kind: input, shape index: {}]
  %s11 = inlined_call_operand.hbm [shape: f32[16,32], index: 11, kind: output, shape index: {}]
  %s12 = sld [smem:[#allocation0]]
  $region66: #{tpu_custom_call.1} parent=0
    _
  %s14 = ssub.s32 1, %s12
  %s15 = scalar_select 0, %s14, %s12
  $region1: #{tpu_custom_call.1} parent=0
    #allocation2 [shape = 'u8[24576]{0}', space=vmem, size = 0x6000, scoped, tag = 'input window, operand 1, single buffered']
    #allocation3 [shape = 's32[1]{0}', space=sflag, size = 0x4, scoped, tag = 'scoped memory for tpu_custom_call.1']
    #allocation4 [shape = 's32[1]{0}', space=sflag, size = 0x4, scoped, tag = 'scoped memory for tpu_custom_call.1']
    #allocation5 [shape = 'u8[65536]{0}', space=vmem, size = 0x10000, scoped, tag = 'input window, operand 5, single buffered']
    #allocation6 [shape = 's32[1]{0}', space=sflag, size = 0x4, scoped, tag = 'scoped memory for tpu_custom_call.1']
    #allocation7 [shape = 'u8[65536]{0}', space=vmem, size = 0x10000, scoped, tag = 'input window, operand 7, single buffered']
    #allocation8 [shape = 'u8[8192]{0}', space=vmem, size = 0x2000, scoped, tag = 'output window, operand 0, single buffered']
    %16 = vsyncpa [#allocation3], 0
    %17 = vsyncpa [#allocation6], 0
    %18 = vsyncpa [#allocation4], 0
    // Predicated region
    $region2: #{tpu_custom_call.1} parent=1 // pred_check
      _
    $region3: #{tpu_custom_call.1} parent=1 // pred_check_branch
      %20 = sbr.rel (0) target = $region5
    $region4: #{tpu_custom_call.1} parent=1 // pred_region
      _
    $region5: #{tpu_custom_call.1} parent=1 // pred_fallthru
      _
    // Predicated region
    $region6: #{tpu_custom_call.1} parent=1 // pred_check
      _
    $region7: #{tpu_custom_call.1} parent=1 // pred_check_branch
      %22 = sbr.rel (0) target = $region9
    $region8: #{tpu_custom_call.1} parent=1 // pred_region
      %s24 = ssub.s32 768, 768
      %25 = vsyncadd [#allocation3], %s24
      %s26 = sshll.u32 [#allocation2], 4
      %s27 = int_to_ptr.vmem [resolvable:$true] %s26
      %32 = dma.hbm_to_vmem [thread:$0]  %s1, 768, %s27, [#allocation3], 384, 384, 24
    $region9: #{tpu_custom_call.1} parent=1 // pred_fallthru
      _
    // Predicated region
    $region10: #{tpu_custom_call.1} parent=1 // pred_check
      _
    $region11: #{tpu_custom_call.1} parent=1 // pred_check_branch
      %34 = sbr.rel (0) target = $region13
    $region12: #{tpu_custom_call.1} parent=1 // pred_region
      _
    $region13: #{tpu_custom_call.1} parent=1 // pred_fallthru
      _
    // Predicated region
    $region14: #{tpu_custom_call.1} parent=1 // pred_check
      _
    $region15: #{tpu_custom_call.1} parent=1 // pred_check_branch
      %36 = sbr.rel (0) target = $region17
    $region16: #{tpu_custom_call.1} parent=1 // pred_region
      _
    $region17: #{tpu_custom_call.1} parent=1 // pred_fallthru
      _
    // Predicated region
    $region18: #{tpu_custom_call.1} parent=1 // pred_check
      _
    $region19: #{tpu_custom_call.1} parent=1 // pred_check_branch
      %38 = sbr.rel (0) target = $region21
    $region20: #{tpu_custom_call.1} parent=1 // pred_region
      _
    $region21: #{tpu_custom_call.1} parent=1 // pred_fallthru
      _
    // Predicated region
    $region22: #{tpu_custom_call.1} parent=1 // pred_check
      _
    $region23: #{tpu_custom_call.1} parent=1 // pred_check_branch
      %40 = sbr.rel (0) target = $region25
    $region24: #{tpu_custom_call.1} parent=1 // pred_region
      %s42 = ssub.s32 2048, 2048
      %43 = vsyncadd [#allocation6], %s42
      %s44 = sshll.u32 [#allocation5], 4
      %s45 = int_to_ptr.vmem [resolvable:$true] %s44
      %50 = dma.hbm_to_vmem [thread:$0]  %s5, 2048, %s45, [#allocation6], 128, 128, 8
    $region25: #{tpu_custom_call.1} parent=1 // pred_fallthru
      _
    // Predicated region
    $region26: #{tpu_custom_call.1} parent=1 // pred_check
      _
    $region27: #{tpu_custom_call.1} parent=1 // pred_check_branch
      %52 = sbr.rel (0) target = $region29
    $region28: #{tpu_custom_call.1} parent=1 // pred_region
      _
    $region29: #{tpu_custom_call.1} parent=1 // pred_fallthru
      _
    // Predicated region
    $region30: #{tpu_custom_call.1} parent=1 // pred_check
      _
    $region31: #{tpu_custom_call.1} parent=1 // pred_check_branch
      %54 = sbr.rel (0) target = $region33
    $region32: #{tpu_custom_call.1} parent=1 // pred_region
      %s56 = ssub.s32 2048, 2048
      %57 = vsyncadd [#allocation6], %s56
      %s58 = sshll.u32 [#allocation7], 4
      %s59 = int_to_ptr.vmem [resolvable:$true] %s58
      %64 = dma.hbm_to_vmem [thread:$0]  %s7, 2048, %s59, [#allocation6], 128, 128, 8
    $region33: #{tpu_custom_call.1} parent=1 // pred_fallthru
      _
    // Predicated region
    $region34: #{tpu_custom_call.1} parent=1 // pred_check
      _
    $region35: #{tpu_custom_call.1} parent=1 // pred_check_branch
      %66 = sbr.rel (0) target = $region37
    $region36: #{tpu_custom_call.1} parent=1 // pred_region
      _
    $region37: #{tpu_custom_call.1} parent=1 // pred_fallthru
      _
    // Predicated region
    $region38: #{tpu_custom_call.1} parent=1 // pred_check
      _
    $region39: #{tpu_custom_call.1} parent=1 // pred_check_branch
      %68 = sbr.rel (0) target = $region41
    $region40: #{tpu_custom_call.1} parent=1 // pred_region
      _
    $region41: #{tpu_custom_call.1} parent=1 // pred_fallthru
      _
    // Predicated region
    $region42: #{tpu_custom_call.1} parent=1 // pred_check
      _
    $region43: #{tpu_custom_call.1} parent=1 // pred_check_branch
      %70 = sbr.rel (0) target = $region45
    $region44: #{tpu_custom_call.1} parent=1 // pred_region
      _
    $region45: #{tpu_custom_call.1} parent=1 // pred_fallthru
      _
    // Predicated region
    $region46: #{tpu_custom_call.1} parent=1 // pred_check
      _
    $region47: #{tpu_custom_call.1} parent=1 // pred_check_branch
      %72 = sbr.rel (0) target = $region49
    $region48: #{tpu_custom_call.1} parent=1 // pred_region
      %73 = dma.done [#allocation3], 768
    $region49: #{tpu_custom_call.1} parent=1 // pred_fallthru
      _
    // Predicated region
    $region50: #{tpu_custom_call.1} parent=1 // pred_check
      _
    $region51: #{tpu_custom_call.1} parent=1 // pred_check_branch
      %75 = sbr.rel (0) target = $region53
    $region52: #{tpu_custom_call.1} parent=1 // pred_region
      %76 = dma.done [#allocation6], 2048
    $region53: #{tpu_custom_call.1} parent=1 // pred_fallthru
      _
    // Predicated region
    $region54: #{tpu_custom_call.1} parent=1 // pred_check
      _
    $region55: #{tpu_custom_call.1} parent=1 // pred_check_branch
      %78 = sbr.rel (0) target = $region57
    $region56: #{tpu_custom_call.1} parent=1 // pred_region
      %79 = dma.done [#allocation6], 2048
    $region57: #{tpu_custom_call.1} parent=1 // pred_fallthru
      _
    %v80 = vld [vmem:[%s0] sm:$0xff]
    %v81 = vld [vmem:[%s0 + $0x8] sm:$0xff]
    %v82 = vld [vmem:[#allocation2] sm:$0xff]
    %v83 = vld [vmem:[#allocation2 + $0x8] sm:$0xff]
    %v84 = vld [vmem:[#allocation2 + $0x10] sm:$0xff]
    %v85 = vld [vmem:[#allocation2 + $0x18] sm:$0xff]
    %v86 = vld [vmem:[#allocation2 + $0x20] sm:$0xff]
    %v87 = vld [vmem:[#allocation2 + $0x28] sm:$0xff]
    %v88 = vld [vmem:[%s2] sm:$0x7]
    %v90 = vlaneseq
    %v91 = vshrl.u32 %v90, 7
    %v92 = vsub.s32 0, %v91
    %v93 = vrot.slane %v88, %v92
    %v94 = vlaneseq
    %v95 = vshrl.u32 %v94, 7
    %v96 = vsub.s32 1, %v95
    %v97 = vrot.slane %v88, %v96
    %v98 = vlaneseq
    %v99 = vshrl.u32 %v98, 7
    %v100 = vsub.s32 2, %v99
    %v101 = vrot.slane %v88, %v100
    %vm105 = vcmask 130048
    %v107 = vsel %vm105, %v80, 0
    %v110 = vsel %vm105, %v81, 0
    %112 = vmatprep.subr.mxu0 %v83
    %113 = vmatpush1.msra.mxu0 %v82
    %114 = vmatprep.subr.mxu0 %v86
    %115 = vmatpush1.msra.mxu0 %v85
    %116 = vmatprep.subr.mxu0 0.0
    %117 = vmatpush1.msra.mxu0 0.0
    %118 = vmatprep.subr.mxu0 0.0
    %119 = vmatpush1.msra.mxu0 0.0
    %120 = vmatprep.subr.mxu0 0.0
    %121 = vmatpush1.msra.mxu0 0.0
    %122 = vmatprep.subr.mxu0 0.0
    %123 = vmatpush1.msra.mxu0 0.0
    %124 = vmatprep.subr.mxu0 0.0
    %125 = vmatpush1.msra.mxu0 0.0
    %126 = vmatprep.subr.mxu0 0.0
    %127 = vmatpush1.msra.mxu0 0.0
    %128 = vmatprep.subr.mxu0 0.0
    %129 = vmatpush1.msra.mxu0 0.0
    %130 = vmatprep.subr.mxu0 0.0
    %131 = vmatpush1.msra.mxu0 0.0
    %132 = vmatprep.subr.mxu0 0.0
    %133 = vmatpush1.msra.mxu0 0.0
    %134 = vmatprep.subr.mxu0 0.0
    %135 = vmatpush1.msra.mxu0 0.0
    %136 = vmatprep.subr.mxu0 0.0
    %137 = vmatpush1.msra.mxu0 0.0
    %138 = vmatprep.subr.mxu0 0.0
    %139 = vmatpush1.msra.mxu0 0.0
    %140 = vmatprep.subr.mxu0 0.0
    %141 = vmatpush1.msra.mxu0 0.0
    %142 = vmatprep.subr.mxu0 0.0
    %143 = vmatpush1.msra.mxu0 0.0
    %144 = vmatprep.subr.mxu0 0.0
    %145 = vmatpush1.msra.mxu0 0.0
    %146 = vmatprep.subr.mxu0 0.0
    %147 = vmatpush1.msra.mxu0 0.0
    %148 = vmatprep.subr.mxu0 0.0
    %149 = vmatpush1.msra.mxu0 0.0
    %150 = vmatprep.subr.mxu0 0.0
    %151 = vmatpush1.msra.mxu0 0.0
    %152 = vmatprep.subr.mxu0 0.0
    %153 = vmatpush1.msra.mxu0 0.0
    %154 = vmatprep.subr.mxu0 0.0
    %155 = vmatpush1.msra.mxu0 0.0
    %156 = vmatprep.subr.mxu0 0.0
    %157 = vmatpush1.msra.mxu0 0.0
    %158 = vmatprep.subr.mxu0 0.0
    %159 = vmatpush1.msra.mxu0 0.0
    %160 = vmatprep.subr.mxu0 0.0
    %161 = vmatpush1.msra.mxu0 0.0
    %162 = vmatprep.subr.mxu0 0.0
    %163 = vmatpush1.msra.mxu0 0.0
    %164 = vmatprep.subr.mxu0 0.0
    %165 = vmatpush1.msra.mxu0 0.0
    %166 = vmatprep.subr.mxu0 0.0
    %167 = vmatpush1.msra.mxu0 0.0
    %168 = vmatprep.subr.mxu0 0.0
    %169 = vmatpush1.msra.mxu0 0.0
    %170 = vmatprep.subr.mxu0 0.0
    %171 = vmatpush1.msra.mxu0 0.0
    %172 = vmatprep.subr.mxu0 0.0
    %173 = vmatpush1.msra.mxu0 0.0
    %174 = vmatprep.subr.mxu0 0.0
    %175 = vmatpush1.msra.mxu0 0.0
    %176 = vmatprep.mubr.f32.mxu0 0.0
    %177 = vmatmul.mubr.f32.gmra.mrb[0].mxu0 %v107
    %v178 = vpop.f32.mrb[0].mxu0
    %v179 = vadd.f32 %v93, %v178
    %v180 = vpop.f32.mrb[0].mxu0
    %v181 = vadd.f32 %v97, %v180
    %182 = vmatprep.mubr.f32.mxu0 0.0
    %183 = vmatmul.mubr.f32.gmra.mrb[0].mxu0 %v110
    %v184 = vpop.f32.mrb[0].mxu0
    %v185 = vadd.f32 %v93, %v184
    %v186 = vpop.f32.mrb[0].mxu0
    %v187 = vadd.f32 %v97, %v186
    %188 = vdwg.mxu0
    %189 = vmatprep.subr.mxu0 0.0
    %190 = vmatpush1.msra.mxu0 %v84
    %191 = vmatprep.subr.mxu0 0.0
    %192 = vmatpush1.msra.mxu0 %v87
    %193 = vmatprep.subr.mxu0 0.0
    %194 = vmatpush1.msra.mxu0 0.0
    %195 = vmatprep.subr.mxu0 0.0
    %196 = vmatpush1.msra.mxu0 0.0
    %197 = vmatprep.subr.mxu0 0.0
    %198 = vmatpush1.msra.mxu0 0.0
    %199 = vmatprep.subr.mxu0 0.0
    %200 = vmatpush1.msra.mxu0 0.0
    %201 = vmatprep.subr.mxu0 0.0
    %202 = vmatpush1.msra.mxu0 0.0
    %203 = vmatprep.subr.mxu0 0.0
    %204 = vmatpush1.msra.mxu0 0.0
    %205 = vmatprep.subr.mxu0 0.0
    %206 = vmatpush1.msra.mxu0 0.0
    %207 = vmatprep.subr.mxu0 0.0
    %208 = vmatpush1.msra.mxu0 0.0
    %209 = vmatprep.subr.mxu0 0.0
    %210 = vmatpush1.msra.mxu0 0.0
    %211 = vmatprep.subr.mxu0 0.0
    %212 = vmatpush1.msra.mxu0 0.0
    %213 = vmatprep.subr.mxu0 0.0
    %214 = vmatpush1.msra.mxu0 0.0
    %215 = vmatprep.subr.mxu0 0.0
    %216 = vmatpush1.msra.mxu0 0.0
    %217 = vmatprep.subr.mxu0 0.0
    %218 = vmatpush1.msra.mxu0 0.0
    %219 = vmatprep.subr.mxu0 0.0
    %220 = vmatpush1.msra.mxu0 0.0
    %221 = vmatprep.subr.mxu0 0.0
    %222 = vmatpush1.msra.mxu0 0.0
    %223 = vmatprep.subr.mxu0 0.0
    %224 = vmatpush1.msra.mxu0 0.0
    %225 = vmatprep.subr.mxu0 0.0
    %226 = vmatpush1.msra.mxu0 0.0
    %227 = vmatprep.subr.mxu0 0.0
    %228 = vmatpush1.msra.mxu0 0.0
    %229 = vmatprep.subr.mxu0 0.0
    %230 = vmatpush1.msra.mxu0 0.0
    %231 = vmatprep.subr.mxu0 0.0
    %232 = vmatpush1.msra.mxu0 0.0
    %233 = vmatprep.subr.mxu0 0.0
    %234 = vmatpush1.msra.mxu0 0.0
    %235 = vmatprep.subr.mxu0 0.0
    %236 = vmatpush1.msra.mxu0 0.0
    %237 = vmatprep.subr.mxu0 0.0
    %238 = vmatpush1.msra.mxu0 0.0
    %239 = vmatprep.subr.mxu0 0.0
    %240 = vmatpush1.msra.mxu0 0.0
    %241 = vmatprep.subr.mxu0 0.0
    %242 = vmatpush1.msra.mxu0 0.0
    %243 = vmatprep.subr.mxu0 0.0
    %244 = vmatpush1.msra.mxu0 0.0
    %245 = vmatprep.subr.mxu0 0.0
    %246 = vmatpush1.msra.mxu0 0.0
    %247 = vmatprep.subr.mxu0 0.0
    %248 = vmatpush1.msra.mxu0 0.0
    %249 = vmatprep.subr.mxu0 0.0
    %250 = vmatpush1.msra.mxu0 0.0
    %251 = vmatprep.subr.mxu0 0.0
    %252 = vmatpush1.msra.mxu0 0.0
    %253 = vmatprep.mubr.f32.mxu0 0.0
    %254 = vmatmul.mubr.f32.gmra.mrb[0].mxu0 %v107
    %v255 = vpop.f32.mrb[0].mxu0
    %v256 = vadd.f32 %v101, %v255
    %v257 = vpop.f32.mrb[0].mxu0
    %258 = vmatprep.mubr.f32.mxu0 0.0
    %259 = vmatmul.mubr.f32.gmra.mrb[0].mxu0 %v110
    %v260 = vpop.f32.mrb[0].mxu0
    %v261 = vadd.f32 %v101, %v260
    %v262 = vpop.f32.mrb[0].mxu0
    %263 = vdwg.mxu0
    %v264 = vmax.f32 %v179, 0.0
    %v265 = vmax.f32 %v185, 0.0
    %v266 = vld [vmem:[%s3] sm:$0xff]
    %v267 = vld [vmem:[%s3 + $0x8] sm:$0xff]
    %v268 = vld [vmem:[%s3 + $0x10] sm:$0xff]
    %v269 = vld [vmem:[%s3 + $0x18] sm:$0xff]
    %v270 = vld [vmem:[%s3 + $0x20] sm:$0xff]
    %v271 = vld [vmem:[%s3 + $0x28] sm:$0xff]
    %v272 = vld [vmem:[%s3 + $0x30] sm:$0xff]
    %v273 = vld [vmem:[%s3 + $0x38] sm:$0xff]
    %v274 = vld [vmem:[%s3 + $0x40] sm:$0xff]
    %v275 = vld [vmem:[%s3 + $0x48] sm:$0xff]
    %v276 = vld [vmem:[%s3 + $0x50] sm:$0xff]
    %v277 = vld [vmem:[%s3 + $0x58] sm:$0xff]
    %v278 = vld [vmem:[%s3 + $0x60] sm:$0xff]
    %v279 = vld [vmem:[%s3 + $0x68] sm:$0xff]
    %v280 = vld [vmem:[%s3 + $0x70] sm:$0xff]
    %v281 = vld [vmem:[%s3 + $0x78] sm:$0xff]
    %v282 = vld [vmem:[%s4] sm:$0x1]
    %v284 = vlaneseq
    %v285 = vshrl.u32 %v284, 7
    %v286 = vsub.s32 0, %v285
    %v287 = vrot.slane %v282, %v286
    %289 = vmatprep.subr.mxu0 0.0
    %290 = vmatpush1.msra.mxu0 %v266
    %291 = vmatprep.subr.mxu0 0.0
    %292 = vmatpush1.msra.mxu0 %v267
    %293 = vmatprep.subr.mxu0 0.0
    %294 = vmatpush1.msra.mxu0 %v268
    %295 = vmatprep.subr.mxu0 0.0
    %296 = vmatpush1.msra.mxu0 %v269
    %297 = vmatprep.subr.mxu0 0.0
    %298 = vmatpush1.msra.mxu0 %v270
    %299 = vmatprep.subr.mxu0 0.0
    %300 = vmatpush1.msra.mxu0 %v271
    %301 = vmatprep.subr.mxu0 0.0
    %302 = vmatpush1.msra.mxu0 %v272
    %303 = vmatprep.subr.mxu0 0.0
    %304 = vmatpush1.msra.mxu0 %v273
    %305 = vmatprep.subr.mxu0 0.0
    %306 = vmatpush1.msra.mxu0 %v274
    %307 = vmatprep.subr.mxu0 0.0
    %308 = vmatpush1.msra.mxu0 %v275
    %309 = vmatprep.subr.mxu0 0.0
    %310 = vmatpush1.msra.mxu0 %v276
    %311 = vmatprep.subr.mxu0 0.0
    %312 = vmatpush1.msra.mxu0 %v277
    %313 = vmatprep.subr.mxu0 0.0
    %314 = vmatpush1.msra.mxu0 %v278
    %315 = vmatprep.subr.mxu0 0.0
    %316 = vmatpush1.msra.mxu0 %v279
    %317 = vmatprep.subr.mxu0 0.0
    %318 = vmatpush1.msra.mxu0 %v280
    %319 = vmatprep.subr.mxu0 0.0
    %320 = vmatpush1.msra.mxu0 %v281
    %321 = vmatprep.subr.mxu0 0.0
    %322 = vmatpush1.msra.mxu0 0.0
    %323 = vmatprep.subr.mxu0 0.0
    %324 = vmatpush1.msra.mxu0 0.0
    %325 = vmatprep.subr.mxu0 0.0
    %326 = vmatpush1.msra.mxu0 0.0
    %327 = vmatprep.subr.mxu0 0.0
    %328 = vmatpush1.msra.mxu0 0.0
    %329 = vmatprep.subr.mxu0 0.0
    %330 = vmatpush1.msra.mxu0 0.0
    %331 = vmatprep.subr.mxu0 0.0
    %332 = vmatpush1.msra.mxu0 0.0
    %333 = vmatprep.subr.mxu0 0.0
    %334 = vmatpush1.msra.mxu0 0.0
    %335 = vmatprep.subr.mxu0 0.0
    %336 = vmatpush1.msra.mxu0 0.0
    %337 = vmatprep.subr.mxu0 0.0
    %338 = vmatpush1.msra.mxu0 0.0
    %339 = vmatprep.subr.mxu0 0.0
    %340 = vmatpush1.msra.mxu0 0.0
    %341 = vmatprep.subr.mxu0 0.0
    %342 = vmatpush1.msra.mxu0 0.0
    %343 = vmatprep.subr.mxu0 0.0
    %344 = vmatpush1.msra.mxu0 0.0
    %345 = vmatprep.subr.mxu0 0.0
    %346 = vmatpush1.msra.mxu0 0.0
    %347 = vmatprep.subr.mxu0 0.0
    %348 = vmatpush1.msra.mxu0 0.0
    %349 = vmatprep.subr.mxu0 0.0
    %350 = vmatpush1.msra.mxu0 0.0
    %351 = vmatprep.subr.mxu0 0.0
    %352 = vmatpush1.msra.mxu0 0.0
    %353 = vmatprep.mubr.f32.mxu0 0.0
    %354 = vmatmul.mubr.f32.gmra.mrb[0].mxu0 %v264
    %v355 = vpop.f32.mrb[0].mxu0
    %v356 = vadd.f32 %v287, %v355
    %v357 = vpop.f32.mrb[0].mxu0
    %358 = vmatprep.mubr.f32.mxu0 0.0
    %359 = vmatmul.mubr.f32.gmra.mrb[0].mxu0 %v265
    %v360 = vpop.f32.mrb[0].mxu0
    %v361 = vadd.f32 %v287, %v360
    %v362 = vpop.f32.mrb[0].mxu0
    %363 = vdwg.mxu0
    %v364 = vadd.f32 %v356, %v264
    %v365 = vadd.f32 %v361, %v265
    %366 = vrot.lane.b32.xlu0 %v256, 32
    %v367 = vpop.permute.xlu0 %366
    %368 = vrot.lane.b32.xlu0 %v261, 32
    %v369 = vpop.permute.xlu0 %368
    %v370 = vadd.f32 %v181, %v367
    %v371 = vadd.f32 %v187, %v369
    %v372 = vmax.f32 %v370, 0.0
    %v373 = vmax.f32 %v371, 0.0
    %374 = vrot.lane.b32.xlu0 %v256, 64
    %v375 = vpop.permute.xlu0 %374
    %376 = vrot.lane.b32.xlu0 %v261, 64
    %v377 = vpop.permute.xlu0 %376
    %v378 = vadd.f32 %v181, %v375
    %v379 = vadd.f32 %v187, %v377
    %v380 = vmax.f32 %v378, 0.0
    %v381 = vmax.f32 %v379, 0.0
    %v382 = vadd.f32 %v372, %v380
    %v383 = vadd.f32 %v373, %v381
    %384 = vrot.lane.b32.xlu0 %v256, 96
    %v385 = vpop.permute.xlu0 %384
    %386 = vrot.lane.b32.xlu0 %v261, 96
    %v387 = vpop.permute.xlu0 %386
    %v388 = vadd.f32 %v181, %v385
    %v389 = vadd.f32 %v187, %v387
    %v390 = vmax.f32 %v388, 0.0
    %v391 = vmax.f32 %v389, 0.0
    %v392 = vadd.f32 %v382, %v390
    %v393 = vadd.f32 %v383, %v391
    %v394 = vld [vmem:[#allocation5] sm:$0xff]
    %v395 = vld [vmem:[#allocation5 + $0x8] sm:$0xff]
    %v396 = vld [vmem:[#allocation5 + $0x10] sm:$0xff]
    %v397 = vld [vmem:[#allocation5 + $0x18] sm:$0xff]
    %v398 = vld [vmem:[#allocation5 + $0x20] sm:$0xff]
    %v399 = vld [vmem:[#allocation5 + $0x28] sm:$0xff]
    %v400 = vld [vmem:[#allocation5 + $0x30] sm:$0xff]
    %v401 = vld [vmem:[#allocation5 + $0x38] sm:$0xff]
    %v402 = vld [vmem:[#allocation5 + $0x40] sm:$0xff]
    %v403 = vld [vmem:[#allocation5 + $0x48] sm:$0xff]
    %v404 = vld [vmem:[#allocation5 + $0x50] sm:$0xff]
    %v405 = vld [vmem:[#allocation5 + $0x58] sm:$0xff]
    %v406 = vld [vmem:[#allocation5 + $0x60] sm:$0xff]
    %v407 = vld [vmem:[#allocation5 + $0x68] sm:$0xff]
    %v408 = vld [vmem:[#allocation5 + $0x70] sm:$0xff]
    %v409 = vld [vmem:[#allocation5 + $0x78] sm:$0xff]
    %v410 = vld [vmem:[%s6] sm:$0x1]
    %v412 = vlaneseq
    %v413 = vshrl.u32 %v412, 7
    %v414 = vsub.s32 0, %v413
    %v415 = vrot.slane %v410, %v414
    %417 = vmatprep.subr.mxu0 0.0
    %418 = vmatpush1.msra.mxu0 %v394
    %419 = vmatprep.subr.mxu0 0.0
    %420 = vmatpush1.msra.mxu0 %v395
    %421 = vmatprep.subr.mxu0 0.0
    %422 = vmatpush1.msra.mxu0 %v396
    %423 = vmatprep.subr.mxu0 0.0
    %424 = vmatpush1.msra.mxu0 %v397
    %425 = vmatprep.subr.mxu0 0.0
    %426 = vmatpush1.msra.mxu0 %v398
    %427 = vmatprep.subr.mxu0 0.0
    %428 = vmatpush1.msra.mxu0 %v399
    %429 = vmatprep.subr.mxu0 0.0
    %430 = vmatpush1.msra.mxu0 %v400
    %431 = vmatprep.subr.mxu0 0.0
    %432 = vmatpush1.msra.mxu0 %v401
    %433 = vmatprep.subr.mxu0 0.0
    %434 = vmatpush1.msra.mxu0 %v402
    %435 = vmatprep.subr.mxu0 0.0
    %436 = vmatpush1.msra.mxu0 %v403
    %437 = vmatprep.subr.mxu0 0.0
    %438 = vmatpush1.msra.mxu0 %v404
    %439 = vmatprep.subr.mxu0 0.0
    %440 = vmatpush1.msra.mxu0 %v405
    %441 = vmatprep.subr.mxu0 0.0
    %442 = vmatpush1.msra.mxu0 %v406
    %443 = vmatprep.subr.mxu0 0.0
    %444 = vmatpush1.msra.mxu0 %v407
    %445 = vmatprep.subr.mxu0 0.0
    %446 = vmatpush1.msra.mxu0 %v408
    %447 = vmatprep.subr.mxu0 0.0
    %448 = vmatpush1.msra.mxu0 %v409
    %449 = vmatprep.subr.mxu0 0.0
    %450 = vmatpush1.msra.mxu0 0.0
    %451 = vmatprep.subr.mxu0 0.0
    %452 = vmatpush1.msra.mxu0 0.0
    %453 = vmatprep.subr.mxu0 0.0
    %454 = vmatpush1.msra.mxu0 0.0
    %455 = vmatprep.subr.mxu0 0.0
    %456 = vmatpush1.msra.mxu0 0.0
    %457 = vmatprep.subr.mxu0 0.0
    %458 = vmatpush1.msra.mxu0 0.0
    %459 = vmatprep.subr.mxu0 0.0
    %460 = vmatpush1.msra.mxu0 0.0
    %461 = vmatprep.subr.mxu0 0.0
    %462 = vmatpush1.msra.mxu0 0.0
    %463 = vmatprep.subr.mxu0 0.0
    %464 = vmatpush1.msra.mxu0 0.0
    %465 = vmatprep.subr.mxu0 0.0
    %466 = vmatpush1.msra.mxu0 0.0
    %467 = vmatprep.subr.mxu0 0.0
    %468 = vmatpush1.msra.mxu0 0.0
    %469 = vmatprep.subr.mxu0 0.0
    %470 = vmatpush1.msra.mxu0 0.0
    %471 = vmatprep.subr.mxu0 0.0
    %472 = vmatpush1.msra.mxu0 0.0
    %473 = vmatprep.subr.mxu0 0.0
    %474 = vmatpush1.msra.mxu0 0.0
    %475 = vmatprep.subr.mxu0 0.0
    %476 = vmatpush1.msra.mxu0 0.0
    %477 = vmatprep.subr.mxu0 0.0
    %478 = vmatpush1.msra.mxu0 0.0
    %479 = vmatprep.subr.mxu0 0.0
    %480 = vmatpush1.msra.mxu0 0.0
    %481 = vmatprep.mubr.f32.mxu0 0.0
    %482 = vmatmul.mubr.f32.gmra.mrb[0].mxu0 %v392
    %v483 = vpop.f32.mrb[0].mxu0
    %v484 = vadd.f32 %v415, %v483
    %v485 = vpop.f32.mrb[0].mxu0
    %486 = vmatprep.mubr.f32.mxu0 0.0
    %487 = vmatmul.mubr.f32.gmra.mrb[0].mxu0 %v393
    %v488 = vpop.f32.mrb[0].mxu0
    %v489 = vadd.f32 %v415, %v488
    %v490 = vpop.f32.mrb[0].mxu0
    %491 = vdwg.mxu0
    %v492 = vadd.f32 %v484, %v392
    %v493 = vadd.f32 %v489, %v393
    %v494 = vadd.f32 %v364, %v492
    %v495 = vadd.f32 %v365, %v493
    %v496 = vld [vmem:[#allocation7] sm:$0xff]
    %v497 = vld [vmem:[#allocation7 + $0x8] sm:$0xff]
    %v498 = vld [vmem:[#allocation7 + $0x10] sm:$0xff]
    %v499 = vld [vmem:[#allocation7 + $0x18] sm:$0xff]
    %v500 = vld [vmem:[#allocation7 + $0x20] sm:$0xff]
    %v501 = vld [vmem:[#allocation7 + $0x28] sm:$0xff]
    %v502 = vld [vmem:[#allocation7 + $0x30] sm:$0xff]
    %v503 = vld [vmem:[#allocation7 + $0x38] sm:$0xff]
    %v504 = vld [vmem:[#allocation7 + $0x40] sm:$0xff]
    %v505 = vld [vmem:[#allocation7 + $0x48] sm:$0xff]
    %v506 = vld [vmem:[#allocation7 + $0x50] sm:$0xff]
    %v507 = vld [vmem:[#allocation7 + $0x58] sm:$0xff]
    %v508 = vld [vmem:[#allocation7 + $0x60] sm:$0xff]
    %v509 = vld [vmem:[#allocation7 + $0x68] sm:$0xff]
    %v510 = vld [vmem:[#allocation7 + $0x70] sm:$0xff]
    %v511 = vld [vmem:[#allocation7 + $0x78] sm:$0xff]
    %v512 = vld [vmem:[%s8] sm:$0x1]
    %v514 = vlaneseq
    %v515 = vshrl.u32 %v514, 7
    %v516 = vsub.s32 0, %v515
    %v517 = vrot.slane %v512, %v516
    %519 = vmatprep.subr.mxu0 0.0
    %520 = vmatpush1.msra.mxu0 %v496
    %521 = vmatprep.subr.mxu0 0.0
    %522 = vmatpush1.msra.mxu0 %v497
    %523 = vmatprep.subr.mxu0 0.0
    %524 = vmatpush1.msra.mxu0 %v498
    %525 = vmatprep.subr.mxu0 0.0
    %526 = vmatpush1.msra.mxu0 %v499
    %527 = vmatprep.subr.mxu0 0.0
    %528 = vmatpush1.msra.mxu0 %v500
    %529 = vmatprep.subr.mxu0 0.0
    %530 = vmatpush1.msra.mxu0 %v501
    %531 = vmatprep.subr.mxu0 0.0
    %532 = vmatpush1.msra.mxu0 %v502
    %533 = vmatprep.subr.mxu0 0.0
    %534 = vmatpush1.msra.mxu0 %v503
    %535 = vmatprep.subr.mxu0 0.0
    %536 = vmatpush1.msra.mxu0 %v504
    %537 = vmatprep.subr.mxu0 0.0
    %538 = vmatpush1.msra.mxu0 %v505
    %539 = vmatprep.subr.mxu0 0.0
    %540 = vmatpush1.msra.mxu0 %v506
    %541 = vmatprep.subr.mxu0 0.0
    %542 = vmatpush1.msra.mxu0 %v507
    %543 = vmatprep.subr.mxu0 0.0
    %544 = vmatpush1.msra.mxu0 %v508
    %545 = vmatprep.subr.mxu0 0.0
    %546 = vmatpush1.msra.mxu0 %v509
    %547 = vmatprep.subr.mxu0 0.0
    %548 = vmatpush1.msra.mxu0 %v510
    %549 = vmatprep.subr.mxu0 0.0
    %550 = vmatpush1.msra.mxu0 %v511
    %551 = vmatprep.subr.mxu0 0.0
    %552 = vmatpush1.msra.mxu0 0.0
    %553 = vmatprep.subr.mxu0 0.0
    %554 = vmatpush1.msra.mxu0 0.0
    %555 = vmatprep.subr.mxu0 0.0
    %556 = vmatpush1.msra.mxu0 0.0
    %557 = vmatprep.subr.mxu0 0.0
    %558 = vmatpush1.msra.mxu0 0.0
    %559 = vmatprep.subr.mxu0 0.0
    %560 = vmatpush1.msra.mxu0 0.0
    %561 = vmatprep.subr.mxu0 0.0
    %562 = vmatpush1.msra.mxu0 0.0
    %563 = vmatprep.subr.mxu0 0.0
    %564 = vmatpush1.msra.mxu0 0.0
    %565 = vmatprep.subr.mxu0 0.0
    %566 = vmatpush1.msra.mxu0 0.0
    %567 = vmatprep.subr.mxu0 0.0
    %568 = vmatpush1.msra.mxu0 0.0
    %569 = vmatprep.subr.mxu0 0.0
    %570 = vmatpush1.msra.mxu0 0.0
    %571 = vmatprep.subr.mxu0 0.0
    %572 = vmatpush1.msra.mxu0 0.0
    %573 = vmatprep.subr.mxu0 0.0
    %574 = vmatpush1.msra.mxu0 0.0
    %575 = vmatprep.subr.mxu0 0.0
    %576 = vmatpush1.msra.mxu0 0.0
    %577 = vmatprep.subr.mxu0 0.0
    %578 = vmatpush1.msra.mxu0 0.0
    %579 = vmatprep.subr.mxu0 0.0
    %580 = vmatpush1.msra.mxu0 0.0
    %581 = vmatprep.subr.mxu0 0.0
    %582 = vmatpush1.msra.mxu0 0.0
    %583 = vmatprep.mubr.f32.mxu0 0.0
    %584 = vmatmul.mubr.f32.gmra.mrb[0].mxu0 %v494
    %v585 = vpop.f32.mrb[0].mxu0
    %v586 = vadd.f32 %v517, %v585
    %v587 = vpop.f32.mrb[0].mxu0
    %588 = vmatprep.mubr.f32.mxu0 0.0
    %589 = vmatmul.mubr.f32.gmra.mrb[0].mxu0 %v495
    %v590 = vpop.f32.mrb[0].mxu0
    %v591 = vadd.f32 %v517, %v590
    %v592 = vpop.f32.mrb[0].mxu0
    %593 = vdwg.mxu0
    %v594 = vmax.f32 %v586, 0.0
    %v595 = vmax.f32 %v591, 0.0
    %v596 = vld [vmem:[%s9] sm:$0xff]
    %v597 = vld [vmem:[%s9 + $0x8] sm:$0xff]
    %v598 = vld [vmem:[%s9 + $0x10] sm:$0xff]
    %v599 = vld [vmem:[%s9 + $0x18] sm:$0xff]
    %v600 = vld [vmem:[%s9 + $0x20] sm:$0xff]
    %v601 = vld [vmem:[%s9 + $0x28] sm:$0xff]
    %v602 = vld [vmem:[%s9 + $0x30] sm:$0xff]
    %v603 = vld [vmem:[%s9 + $0x38] sm:$0xff]
    %v604 = vld [vmem:[%s9 + $0x40] sm:$0xff]
    %v605 = vld [vmem:[%s9 + $0x48] sm:$0xff]
    %v606 = vld [vmem:[%s9 + $0x50] sm:$0xff]
    %v607 = vld [vmem:[%s9 + $0x58] sm:$0xff]
    %v608 = vld [vmem:[%s9 + $0x60] sm:$0xff]
    %v609 = vld [vmem:[%s9 + $0x68] sm:$0xff]
    %v610 = vld [vmem:[%s9 + $0x70] sm:$0xff]
    %v611 = vld [vmem:[%s9 + $0x78] sm:$0xff]
    %612 = vmatprep.subr.mxu0 0.0
    %613 = vmatpush1.msra.mxu0 %v596
    %614 = vmatprep.subr.mxu0 0.0
    %615 = vmatpush1.msra.mxu0 %v597
    %616 = vmatprep.subr.mxu0 0.0
    %617 = vmatpush1.msra.mxu0 %v598
    %618 = vmatprep.subr.mxu0 0.0
    %619 = vmatpush1.msra.mxu0 %v599
    %620 = vmatprep.subr.mxu0 0.0
    %621 = vmatpush1.msra.mxu0 %v600
    %622 = vmatprep.subr.mxu0 0.0
    %623 = vmatpush1.msra.mxu0 %v601
    %624 = vmatprep.subr.mxu0 0.0
    %625 = vmatpush1.msra.mxu0 %v602
    %626 = vmatprep.subr.mxu0 0.0
    %627 = vmatpush1.msra.mxu0 %v603
    %628 = vmatprep.subr.mxu0 0.0
    %629 = vmatpush1.msra.mxu0 %v604
    %630 = vmatprep.subr.mxu0 0.0
    %631 = vmatpush1.msra.mxu0 %v605
    %632 = vmatprep.subr.mxu0 0.0
    %633 = vmatpush1.msra.mxu0 %v606
    %634 = vmatprep.subr.mxu0 0.0
    %635 = vmatpush1.msra.mxu0 %v607
    %636 = vmatprep.subr.mxu0 0.0
    %637 = vmatpush1.msra.mxu0 %v608
    %638 = vmatprep.subr.mxu0 0.0
    %639 = vmatpush1.msra.mxu0 %v609
    %640 = vmatprep.subr.mxu0 0.0
    %641 = vmatpush1.msra.mxu0 %v610
    %642 = vmatprep.subr.mxu0 0.0
    %643 = vmatpush1.msra.mxu0 %v611
    %644 = vmatprep.subr.mxu0 0.0
    %645 = vmatpush1.msra.mxu0 0.0
    %646 = vmatprep.subr.mxu0 0.0
    %647 = vmatpush1.msra.mxu0 0.0
    %648 = vmatprep.subr.mxu0 0.0
    %649 = vmatpush1.msra.mxu0 0.0
    %650 = vmatprep.subr.mxu0 0.0
    %651 = vmatpush1.msra.mxu0 0.0
    %652 = vmatprep.subr.mxu0 0.0
    %653 = vmatpush1.msra.mxu0 0.0
    %654 = vmatprep.subr.mxu0 0.0
    %655 = vmatpush1.msra.mxu0 0.0
    %656 = vmatprep.subr.mxu0 0.0
    %657 = vmatpush1.msra.mxu0 0.0
    %658 = vmatprep.subr.mxu0 0.0
    %659 = vmatpush1.msra.mxu0 0.0
    %660 = vmatprep.subr.mxu0 0.0
    %661 = vmatpush1.msra.mxu0 0.0
    %662 = vmatprep.subr.mxu0 0.0
    %663 = vmatpush1.msra.mxu0 0.0
    %664 = vmatprep.subr.mxu0 0.0
    %665 = vmatpush1.msra.mxu0 0.0
    %666 = vmatprep.subr.mxu0 0.0
    %667 = vmatpush1.msra.mxu0 0.0
    %668 = vmatprep.subr.mxu0 0.0
    %669 = vmatpush1.msra.mxu0 0.0
    %670 = vmatprep.subr.mxu0 0.0
    %671 = vmatpush1.msra.mxu0 0.0
    %672 = vmatprep.subr.mxu0 0.0
    %673 = vmatpush1.msra.mxu0 0.0
    %674 = vmatprep.subr.mxu0 0.0
    %675 = vmatpush1.msra.mxu0 0.0
    %676 = vmatprep.mubr.f32.mxu0 0.0
    %677 = vmatmul.mubr.f32.gmra.mrb[0].mxu0 %v594
    %v678 = vpop.f32.mrb[0].mxu0
    %v679 = vadd.f32 0.0, %v678
    %v680 = vpop.f32.mrb[0].mxu0
    %681 = vmatprep.mubr.f32.mxu0 0.0
    %682 = vmatmul.mubr.f32.gmra.mrb[0].mxu0 %v595
    %v683 = vpop.f32.mrb[0].mxu0
    %v684 = vadd.f32 0.0, %v683
    %v685 = vpop.f32.mrb[0].mxu0
    %686 = vdwg.mxu0
    %v687 = vmul.f32 %v679, 0.25
    %v688 = vmul.f32 %v684, 0.25
    %v689 = vld [vmem:[%s10] sm:$0x1]
    %v691 = vlaneseq
    %v692 = vshrl.u32 %v691, 7
    %v693 = vsub.s32 0, %v692
    %v694 = vrot.slane %v689, %v693
    %v696 = vadd.f32 %v687, %v694
    %v697 = vadd.f32 %v688, %v694
    %vm698 = vcmask 261120
    %699 = vst.msk [vmem:[#allocation8] sm:$0xff] %vm698, %v696
    %700 = vst.msk [vmem:[#allocation8 + $0x8] sm:$0xff] %vm698, %v697
    // Predicated region
    $region58: #{tpu_custom_call.1} parent=1 // pred_check
      _
    $region59: #{tpu_custom_call.1} parent=1 // pred_check_branch
      %702 = sbr.rel (0) target = $region61
    $region60: #{tpu_custom_call.1} parent=1 // pred_region
      %s704 = ssub.s32 256, 256
      %705 = vsyncadd [#allocation4], %s704
      %s706 = sshll.u32 [#allocation8], 4
      %s707 = int_to_ptr.vmem [resolvable:$true] %s706
      %712 = dma.vmem_to_hbm [thread:$0]  %s707, 256, %s11, [#allocation4], 128, 128, 8
    $region61: #{tpu_custom_call.1} parent=1 // pred_fallthru
      _
    // Predicated region
    $region62: #{tpu_custom_call.1} parent=1 // pred_check
      _
    $region63: #{tpu_custom_call.1} parent=1 // pred_check_branch
      %714 = sbr.rel (0) target = $region65
    $region64: #{tpu_custom_call.1} parent=1 // pred_region
      %715 = dma.done [#allocation4], 256
    $region65: #{tpu_custom_call.1} parent=1 // pred_fallthru
      _
    %716 = vsyncpa [#allocation3], 1
    %717 = vsyncpa [#allocation6], 1
    %718 = vsyncpa [#allocation4], 1

</llo_original>
